<compile_context>
chip_gen: v5e
topology: v5e:2x2
jax: 0.10.0
libtpu: 0.0.40
codegen_flags: <defaults>
</compile_context>

<pallas_src>
import functools
import math

import jax
import jax.numpy as jnp
from jax.experimental import pallas as pl
from jax.experimental.pallas import tpu as pltpu


def _gaussian_kernel(coef_ref, out_ref, *, half, step, tile_r):
    """One (tile_r, size) row-tile of B = a * exp(b * (x^2 + y^2)).

    coef_ref: SMEM (2,) f32 -> [a, b] with a = sigma^2/(2*pi), b = -sigma^2/2
    out_ref : VMEM (tile_r, size) f32 row-tile of the output grid
    """
    a = coef_ref[0]
    b = coef_ref[1]
    rows, cols = out_ref.shape
    row0 = pl.program_id(0) * tile_r  # first global row of this tile

    # linspace(-s, s, size)[i] == (i - (size-1)/2) * step,  step = 2*s/(size-1)
    ri = (jax.lax.broadcasted_iota(jnp.int32, (rows, 1), 0) + row0).astype(jnp.float32)
    ci = jax.lax.broadcasted_iota(jnp.int32, (1, cols), 1).astype(jnp.float32)
    x = (ri - half) * step                  # (rows, 1) column coordinates
    y = (ci - half) * step                  # (1, cols) row coordinates

    # Separable Gaussian: O(rows + cols) transcendentals instead of O(rows*cols).
    ex = a * jnp.exp(b * (x * x))           # (rows, 1): ceil(rows/8)  EUP vregs
    ey = jnp.exp(b * (y * y))               # (1, cols): ceil(cols/128) EUP vregs
    out_ref[...] = ex * ey                  # one broadcast vmul + vst per output vreg


# Double-buffered output block budget; conservative enough for v5e's 16 MiB
# scoped-VMEM default and v7x's 64 MiB physical VMEM.
_VMEM_BLOCK_BUDGET = 12 * 1024 * 1024


def _pick_tile_r(size: int) -> int:
    """Row-tile height: a multiple of 8, or the full dim for tiny sizes."""
    if size < 16:
        return size  # single block; row dim equals the full array dim (legal)
    # Aim for >= 2 row programs so both v7x TensorCores get work; on single-TC
    # v5e/v6e the extra grid step is only ~0.35 us of overhead.
    tile_r = pl.cdiv(pl.cdiv(size, 2), 8) * 8
    # Keep the double-buffered f32 output block inside every chip's scoped VMEM.
    while tile_r > 8 and 2 * tile_r * size * 4 > _VMEM_BLOCK_BUDGET:
        tile_r = pl.cdiv(pl.cdiv(tile_r, 2), 8) * 8
    return tile_r


@functools.partial(jax.jit, static_argnames=("size",))
def gaussian_kernel_forward(sigma, *, size: int):
    """B = (sigma^2/(2*pi)) * exp(-sigma^2/2 * d), shape (size, size), f32."""
    s = (size - 1) // 2
    step = (2.0 * s) / (size - 1) if size > 1 else 0.0
    half = (size - 1) / 2.0

    tile_r = _pick_tile_r(size)
    grid = (pl.cdiv(size, tile_r),)  # partial last block handled by Pallas

    sigma = jnp.asarray(sigma, dtype=jnp.float32)
    k = sigma * sigma
    coef = jnp.stack([k / (2.0 * math.pi), -k / 2.0]).astype(jnp.float32)

    kernel = functools.partial(
        _gaussian_kernel, half=float(half), step=float(step), tile_r=tile_r
    )
    return pl.pallas_call(
        kernel,
        out_shape=jax.ShapeDtypeStruct((size, size), jnp.float32),
        grid=grid,
        in_specs=[pl.BlockSpec(memory_space=pltpu.SMEM)],            # [a, b] scalars
        out_specs=pl.BlockSpec((tile_r, size), lambda i: (i, 0)),    # exact-width row tiles
        compiler_params=pltpu.CompilerParams(
            dimension_semantics=("parallel",),  # shard row tiles across TCs on v7x
        ),
    )(coef)


def _reference(sigma, size):
    """Plain-JAX mirror of the PyTorch module."""
    s = (size - 1) // 2
    lin = jnp.linspace(-s, s, size, dtype=jnp.float32)
    _x = jnp.repeat(lin.reshape(size, 1), size, axis=1)
    _y = jnp.repeat(lin.reshape(1, size), size, axis=0)
    d = _x ** 2 + _y ** 2
    k = sigma ** 2
    return (k / (2.0 * math.pi)) * jnp.exp(-k / 2.0 * d)


if __name__ == "__main__":
    key = jax.random.PRNGKey(0)
    sigma = jax.random.uniform(key, (), minval=0.5, maxval=2.0, dtype=jnp.float32)

    # Typical tiny gaussian-kernel size: single (7, 7) block.
    size = 7
    out = jax.block_until_ready(gaussian_kernel_forward(sigma, size=size))
    ref = _reference(sigma, size)
    assert out.shape == (size, size)
    assert out.dtype == jnp.float32
    assert jnp.allclose(out, ref, rtol=1e-5, atol=1e-6)

    # Non-multiple-of-8 size: exercises the partial last row-block path.
    size2 = 33
    sigma2 = jnp.float32(0.8)
    out2 = jax.block_until_ready(gaussian_kernel_forward(sigma2, size=size2))
    ref2 = _reference(sigma2, size2)
    assert out2.shape == (size2, size2)
    assert jnp.allclose(out2, ref2, rtol=1e-5, atol=1e-6)

    # Larger grid: two full row programs, masked tail lane-vreg on the columns.
    size3 = 600
    sigma3 = jnp.float32(0.05)
    out3 = jax.block_until_ready(gaussian_kernel_forward(sigma3, size=size3))
    ref3 = _reference(sigma3, size3)
    assert out3.shape == (size3, size3)
    assert jnp.allclose(out3, ref3, rtol=2e-4, atol=1e-8)

    print("KERNEL_OK")
</pallas_src>

<mosaic_0001>
module attributes {stable_mosaic.version = 11 : i64} {
  func.func @_gaussian_kernel(%arg0: i32, %arg1: memref<2xf32, #tpu.memory_space<smem>>, %arg2: memref<7x7xf32, #tpu.memory_space<vmem>>) attributes {dimension_semantics = [#tpu.dimension_semantics<parallel>], iteration_bounds = array<i64: 1>, scalar_prefetch = 0 : i64, scratch_operands = 0 : i64, tpu.core_type = #tpu.core_type<tc>, window_params = [{transform_indices = @transform_0, window_bounds = array<i64: 2>}, {transform_indices = @transform_1, window_bounds = array<i64: 7, 7>}]} {
    %c0 = arith.constant 0 : index
    %0 = memref.load %arg1[%c0] : memref<2xf32, #tpu.memory_space<smem>>
    %c1 = arith.constant 1 : index
    %1 = memref.load %arg1[%c1] : memref<2xf32, #tpu.memory_space<smem>>
    %c7_i32 = arith.constant 7 : i32
    %2 = arith.muli %arg0, %c7_i32 : i32
    %3 = tpu.iota {dimensions = array<i32: 0>} : vector<7x1xi32>
    %4 = vector.broadcast %2 : i32 to vector<7x1xi32>
    %5 = arith.addi %3, %4 : vector<7x1xi32>
    %6 = arith.sitofp %5 : vector<7x1xi32> to vector<7x1xf32>
    %7 = tpu.iota {dimensions = array<i32: 1>} : vector<1x7xi32>
    %8 = arith.sitofp %7 : vector<1x7xi32> to vector<1x7xf32>
    %cst = arith.constant 3.000000e+00 : f32
    %9 = vector.broadcast %cst : f32 to vector<7x1xf32>
    %10 = arith.subf %6, %9 : vector<7x1xf32>
    %cst_0 = arith.constant 1.000000e+00 : f32
    %11 = vector.broadcast %cst_0 : f32 to vector<7x1xf32>
    %12 = arith.mulf %10, %11 : vector<7x1xf32>
    %cst_1 = arith.constant 3.000000e+00 : f32
    %13 = vector.broadcast %cst_1 : f32 to vector<1x7xf32>
    %14 = arith.subf %8, %13 : vector<1x7xf32>
    %cst_2 = arith.constant 1.000000e+00 : f32
    %15 = vector.broadcast %cst_2 : f32 to vector<1x7xf32>
    %16 = arith.mulf %14, %15 : vector<1x7xf32>
    %17 = arith.mulf %12, %12 : vector<7x1xf32>
    %18 = vector.broadcast %1 : f32 to vector<7x1xf32>
    %19 = arith.mulf %18, %17 : vector<7x1xf32>
    %20 = math.exp %19 : vector<7x1xf32>
    %21 = vector.broadcast %0 : f32 to vector<7x1xf32>
    %22 = arith.mulf %21, %20 : vector<7x1xf32>
    %23 = arith.mulf %16, %16 : vector<1x7xf32>
    %24 = vector.broadcast %1 : f32 to vector<1x7xf32>
    %25 = arith.mulf %24, %23 : vector<1x7xf32>
    %26 = math.exp %25 : vector<1x7xf32>
    %27 = vector.broadcast %22 : vector<7x1xf32> to vector<7x7xf32>
    %28 = vector.broadcast %26 : vector<1x7xf32> to vector<7x7xf32>
    %29 = arith.mulf %27, %28 : vector<7x7xf32>
    %c0_3 = arith.constant 0 : index
    %c0_4 = arith.constant 0 : index
    %30 = vector.load %arg2[%c0_3, %c0_4] : memref<7x7xf32, #tpu.memory_space<vmem>>, vector<7x7xf32>
    tpu.vector_store %arg2[%c0_3, %c0_4], %29 {strides = array<i32>} : memref<7x7xf32, #tpu.memory_space<vmem>>, vector<7x7xf32>,
    return
  }
  func.func @transform_0(%arg0: i32) -> i32 {
    %c0_i32 = arith.constant 0 : i32
    %c0_i32_0 = arith.constant 0 : i32
    return %c0_i32 : i32
  }
  func.func @transform_1(%arg0: i32) -> (i32, i32) {
    %c0_i32 = arith.constant 0 : i32
    %c0_i32_0 = arith.constant 0 : i32
    return %arg0, %c0_i32 : i32, i32
  }
}

</mosaic_0001>

<llo_original>
// kernel: gaussian_kernel_forward.1
$region0: #{gaussian_kernel_forward.1}
  #allocation0 [shape = 'u32[]', space=smem, size = 0x4, offset = 0x4, fixed_abs, tag = 'smem constant byte address 0x4 - core index']
  #allocation1 [shape = 'u32[72,128]{1,0:T(1,128)}', space=vmem, size = 0x9000, scoped, tag = 'internal scratch']
  %s0 = inlined_call_operand.vmem [shape: f32[2], index: 0, kind: input, shape index: {}]
  %s1 = inlined_call_operand.hbm [shape: f32[7,7], index: 1, kind: output, shape index: {}]
  %s2 = sld [smem:[#allocation0]]
  $region18: #{gaussian_kernel_forward.1} parent=0
    _
  %s4 = ssub.s32 1, %s2
  %s5 = scalar_select 0, %s4, %s2
  $region1: #{gaussian_kernel_forward.1} parent=0
    #allocation2 [shape = 'u8[512]{0}', space=smem, size = 0x200, scoped, tag = 'input window, operand 0, single buffered']
    #allocation3 [shape = 's32[1]{0}', space=sflag, size = 0x4, scoped, tag = 'scoped memory for gaussian_kernel_forward.1']
    #allocation4 [shape = 's32[1]{0}', space=sflag, size = 0x4, scoped, tag = 'scoped memory for gaussian_kernel_forward.1']
    #allocation5 [shape = 'u8[4096]{0}', space=vmem, size = 0x1000, scoped, tag = 'output window, operand 0, single buffered']
    %6 = vsyncpa [#allocation4], 0
    %7 = vsyncpa [#allocation3], 0
    // Predicated region
    $region2: #{gaussian_kernel_forward.1} parent=1 // pred_check
      _
    $region3: #{gaussian_kernel_forward.1} parent=1 // pred_check_branch
      %9 = sbr.rel (0) target = $region5
    $region4: #{gaussian_kernel_forward.1} parent=1 // pred_region
      %11 = vsyncadd [#allocation4], 0
      %s13 = sshll.u32 %s0, 4
      %s14 = int_to_ptr.vmem [resolvable:$true] %s13
      %16 = dma.vmem_to_smem %s14, 16, [#allocation2], [#allocation4]
    $region5: #{gaussian_kernel_forward.1} parent=1 // pred_fallthru
      _
    // Predicated region
    $region6: #{gaussian_kernel_forward.1} parent=1 // pred_check
      _
    $region7: #{gaussian_kernel_forward.1} parent=1 // pred_check_branch
      %18 = sbr.rel (0) target = $region9
    $region8: #{gaussian_kernel_forward.1} parent=1 // pred_region
      %20 = dma.done [#allocation4], 16
    $region9: #{gaussian_kernel_forward.1} parent=1 // pred_fallthru
      _
    %21 = sfence
    %s22 = sld [smem:[#allocation2]]
    %s23 = sld [smem:[#allocation2 + $0x1]]
    %s24 = smul.u32 0, 7
    %v25 = vlaneseq
    %v26 = vshrl.u32 %v25, 7
    %v27 = vstv %s24
    %v28 = vadd.s32 %v26, %v27
    %v29 = vcvt.s32.f32 %v28
    %v30 = vlaneseq
    %v31 = vand.u32 %v30, 127
    %v32 = vcvt.s32.f32 %v31
    %v33 = vsub.f32 %v29, 3.0
    %v34 = vsub.f32 %v32, 3.0
    %v35 = vmul.f32 %v33, %v33
    %v36 = vstv %s23
    %v37 = vmul.f32 %v36, %v35
    %v38 = vmul.f32 %v37, 1.442695
    %v39 = vpow.pop %v38
    %v40 = vstv %s22
    %v41 = vmul.f32 %v40, %v39
    %v42 = vmul.f32 %v34, %v34
    %v43 = vmul.f32 %v36, %v42
    %v44 = vmul.f32 %v43, 1.442695
    %v45 = vpow.pop %v44
    %v46 = vmul.f32 %v41, %v45
    %vm47 = vcmask 55296
    %48 = vst.msk [vmem:[#allocation5] sm:$0x7f] %vm47, %v46
    // Predicated region
    $region10: #{gaussian_kernel_forward.1} parent=1 // pred_check
      _
    $region11: #{gaussian_kernel_forward.1} parent=1 // pred_check_branch
      %50 = sbr.rel (0) target = $region13
    $region12: #{gaussian_kernel_forward.1} parent=1 // pred_region
      %52 = vsyncadd [#allocation3], 0
      %s54 = sshll.u32 [#allocation5], 4
      %s55 = int_to_ptr.vmem [resolvable:$true] %s54
      %s56 = sshll.u32 %s1, 4
      %s57 = int_to_ptr.hbm [resolvable:$true] %s56
      %59 = dma.vmem_to_hbm [thread:$0]  %s55, 128, %s57, [#allocation3]
    $region13: #{gaussian_kernel_forward.1} parent=1 // pred_fallthru
      _
    // Predicated region
    $region14: #{gaussian_kernel_forward.1} parent=1 // pred_check
      _
    $region15: #{gaussian_kernel_forward.1} parent=1 // pred_check_branch
      %61 = sbr.rel (0) target = $region17
    $region16: #{gaussian_kernel_forward.1} parent=1 // pred_region
      %63 = dma.done [#allocation3], 128
    $region17: #{gaussian_kernel_forward.1} parent=1 // pred_fallthru
      _
    %64 = vsyncpa [#allocation3], 1
    %65 = vsyncpa [#allocation4], 1

</llo_original>
